<compile_context>
chip_gen: v7x
topology: tpu7x:2x2x1
jax: 0.10.0
libtpu: 0.0.40
codegen_flags: <defaults>
</compile_context>

<pallas_src>
import functools

import jax
import jax.numpy as jnp
from jax.experimental import pallas as pl
from jax.experimental.pallas import tpu as pltpu


def _adjust_saturation_kernel(factors_ref, x_ref, o_ref, *, eps):
    # factors_ref: (B,) f32 in SMEM ; x_ref / o_ref: (1, 3, T) blocks in VMEM.
    f = factors_ref[pl.program_id(0)]          # per-batch saturation factor (scalar)

    x = x_ref[0].astype(jnp.float32)           # (3, T)
    r = x[0:1, :]
    g = x[1:2, :]
    b = x[2:3, :]

    v = jnp.maximum(jnp.maximum(r, g), b)      # value  (1, T)
    mn = jnp.minimum(jnp.minimum(r, g), b)
    c = v - mn                                 # chroma (1, T)

    s = c / (v + eps)                          # kornia rgb_to_hsv saturation
    s_new = jnp.clip(s * f, 0.0, 1.0)          # kornia adjust_saturation_raw

    c_safe = jnp.where(c > 0.0, c, 1.0)
    scale = (s_new * v) / c_safe               # new_chroma / old_chroma
    out = jnp.where(c > 0.0, v - scale * (v - x), x)   # (1,T) broadcasts to (3,T)

    o_ref[0] = out.astype(o_ref.dtype)


def _pick_pixel_tile(n, max_elems=64 * 1024):
    """Largest lane-friendly pixel tile (multiple of 128) that divides n."""
    if n % 128 != 0:
        return n                       # fallback: one full (non-lane-dense) block
    if n <= max_elems:
        # split once so a 2nd TensorCore (v7x) has work even when B == 1
        return n // 2 if (n % 256 == 0 and n > 256) else n
    t = max_elems
    while t >= 128:
        if n % t == 0:
            return t
        t -= 128
    return n


def adjust_saturation(x, factors, *, eps=1e-8):
    """Kornia-style (HSV) saturation adjustment. x: (B, 3, H, W); factors: (B,)."""
    B, C, H, W = x.shape
    if C != 3:
        raise ValueError("adjust_saturation expects an RGB input with C == 3")
    n = H * W
    t = _pick_pixel_tile(n)
    xf = x.reshape(B, 3, n)            # contiguous reshape: no extra HBM pass

    out = pl.pallas_call(
        functools.partial(_adjust_saturation_kernel, eps=eps),
        out_shape=jax.ShapeDtypeStruct((B, 3, n), x.dtype),
        grid=(B, n // t),
        in_specs=[
            pl.BlockSpec(memory_space=pltpu.MemorySpace.SMEM),        # factors (B,)
            pl.BlockSpec((1, 3, t), lambda bi, ti: (bi, 0, ti)),      # image tile
        ],
        out_specs=pl.BlockSpec((1, 3, t), lambda bi, ti: (bi, 0, ti)),
        compiler_params=pltpu.CompilerParams(
            dimension_semantics=("parallel", "parallel")),
    )(factors.astype(jnp.float32), xf)
    return out.reshape(B, 3, H, W)


def random_saturation(x, a, b, key):
    """Forward pass of the PyTorch module: RandomSaturation(saturation=(a, b), p=1.0)."""
    B = x.shape[0]
    factors = jax.random.uniform(key, (B,), dtype=jnp.float32, minval=a, maxval=b)
    return adjust_saturation(x, factors), factors


def _adjust_saturation_ref(x, factors, eps=1e-8):
    """Pure-JAX reference: full kornia rgb_to_hsv -> scale s (clamped) -> hsv_to_rgb."""
    r, g, b = x[:, 0], x[:, 1], x[:, 2]               # (B, H, W) each
    maxc = jnp.maximum(jnp.maximum(r, g), b)
    minc = jnp.minimum(jnp.minimum(r, g), b)
    v = maxc
    deltac = maxc - minc
    s = deltac / (v + eps)
    d_safe = jnp.where(deltac == 0.0, 1.0, deltac)
    rc = (maxc - r) / d_safe
    gc = (maxc - g) / d_safe
    bc = (maxc - b) / d_safe
    h = jnp.where(maxc == g, 2.0 + rc - bc, 4.0 + gc - rc)
    h = jnp.where(maxc == r, bc - gc, h)
    h = (h / 6.0) % 1.0

    f = factors.reshape(-1, 1, 1).astype(x.dtype)
    s = jnp.clip(s * f, 0.0, 1.0)

    h6 = h * 6.0
    hi = (jnp.floor(h6) % 6.0).astype(jnp.int32)
    fr = h6 - jnp.floor(h6)
    p = v * (1.0 - s)
    q = v * (1.0 - fr * s)
    t = v * (1.0 - (1.0 - fr) * s)

    def _pick(table):
        out = table[0]
        for i in range(1, 6):
            out = jnp.where(hi == i, table[i], out)
        return out

    r_o = _pick([v, q, p, p, t, v])
    g_o = _pick([t, v, v, q, p, p])
    b_o = _pick([p, p, t, v, v, q])
    return jnp.stack([r_o, g_o, b_o], axis=1)


if __name__ == "__main__":
    key = jax.random.PRNGKey(0)
    k_img, k_factor = jax.random.split(key)

    B, C, H, W = 2, 3, 16, 16
    a_sat, b_sat = 0.5, 1.5                          # saturation=(a, b), p=1.0
    x = jax.random.uniform(k_img, (B, C, H, W), dtype=jnp.float32)

    # Sample the per-batch factors once so the kernel and reference see the same ones.
    factors = jax.random.uniform(k_factor, (B,), dtype=jnp.float32,
                                 minval=a_sat, maxval=b_sat)

    y = adjust_saturation(x, factors)
    y = jax.block_until_ready(y)

    y_ref = _adjust_saturation_ref(x, factors)
    assert y.shape == (B, C, H, W)
    assert jnp.allclose(y, y_ref, atol=1e-5, rtol=1e-5), "mismatch vs HSV reference"

    print("KERNEL_OK")
</pallas_src>

<mosaic_0001>
module attributes {stable_mosaic.version = 11 : i64} {
  func.func @_adjust_saturation_kernel(%arg0: i32, %arg1: i32, %arg2: memref<2xf32, #tpu.memory_space<smem>>, %arg3: memref<1x3x256xf32, #tpu.memory_space<vmem>>, %arg4: memref<1x3x256xf32, #tpu.memory_space<vmem>>) attributes {dimension_semantics = [#tpu.dimension_semantics<parallel>, #tpu.dimension_semantics<parallel>], iteration_bounds = array<i64: 2, 1>, scalar_prefetch = 0 : i64, scratch_operands = 0 : i64, tpu.core_type = #tpu.core_type<tc>, window_params = [{transform_indices = @transform_0, window_bounds = array<i64: 2>}, {transform_indices = @transform_1, window_bounds = array<i64: 1, 3, 256>}, {transform_indices = @transform_2, window_bounds = array<i64: 1, 3, 256>}]} {
    %0 = arith.index_cast %arg0 : i32 to index
    %1 = memref.load %arg2[%0] : memref<2xf32, #tpu.memory_space<smem>>
    %c0 = arith.constant 0 : index
    %c0_0 = arith.constant 0 : index
    %c0_1 = arith.constant 0 : index
    %2 = vector.load %arg3[%c0, %c0_0, %c0_1] : memref<1x3x256xf32, #tpu.memory_space<vmem>>, vector<1x3x256xf32>
    %3 = vector.shape_cast %2 : vector<1x3x256xf32> to vector<3x256xf32>
    %4 = vector.extract_strided_slice %3 {offsets = [0, 0], sizes = [1, 256], strides = [1, 1]} : vector<3x256xf32> to vector<1x256xf32>
    %5 = vector.extract_strided_slice %3 {offsets = [1, 0], sizes = [1, 256], strides = [1, 1]} : vector<3x256xf32> to vector<1x256xf32>
    %6 = vector.extract_strided_slice %3 {offsets = [2, 0], sizes = [1, 256], strides = [1, 1]} : vector<3x256xf32> to vector<1x256xf32>
    %7 = arith.maximumf %4, %5 : vector<1x256xf32>
    %8 = arith.maximumf %7, %6 : vector<1x256xf32>
    %9 = arith.minimumf %4, %5 : vector<1x256xf32>
    %10 = arith.minimumf %9, %6 : vector<1x256xf32>
    %11 = arith.subf %8, %10 : vector<1x256xf32>
    %cst = arith.constant 9.99999993E-9 : f32
    %12 = vector.broadcast %cst : f32 to vector<1x256xf32>
    %13 = arith.addf %8, %12 : vector<1x256xf32>
    %14 = arith.divf %11, %13 : vector<1x256xf32>
    %15 = vector.broadcast %1 : f32 to vector<1x256xf32>
    %16 = arith.mulf %14, %15 : vector<1x256xf32>
    %cst_2 = arith.constant 0.000000e+00 : f32
    %cst_3 = arith.constant 1.000000e+00 : f32
    %17 = vector.broadcast %cst_2 : f32 to vector<1x256xf32>
    %18 = arith.maximumf %17, %16 : vector<1x256xf32>
    %19 = vector.broadcast %cst_3 : f32 to vector<1x256xf32>
    %20 = arith.minimumf %19, %18 : vector<1x256xf32>
    %cst_4 = arith.constant 0.000000e+00 : f32
    %21 = vector.broadcast %cst_4 : f32 to vector<1x256xf32>
    %22 = arith.cmpf ogt, %11, %21 : vector<1x256xf32>
    %cst_5 = arith.constant 1.000000e+00 : f32
    %23 = vector.broadcast %cst_5 : f32 to vector<1x256xf32>
    %24 = arith.select %22, %11, %23 : vector<1x256xi1>, vector<1x256xf32>
    %25 = arith.mulf %20, %8 : vector<1x256xf32>
    %26 = arith.divf %25, %24 : vector<1x256xf32>
    %cst_6 = arith.constant 0.000000e+00 : f32
    %27 = vector.broadcast %cst_6 : f32 to vector<1x256xf32>
    %28 = arith.cmpf ogt, %11, %27 : vector<1x256xf32>
    %29 = vector.broadcast %8 : vector<1x256xf32> to vector<3x256xf32>
    %30 = arith.subf %29, %3 : vector<3x256xf32>
    %31 = vector.broadcast %26 : vector<1x256xf32> to vector<3x256xf32>
    %32 = arith.mulf %31, %30 : vector<3x256xf32>
    %33 = vector.broadcast %8 : vector<1x256xf32> to vector<3x256xf32>
    %34 = arith.subf %33, %32 : vector<3x256xf32>
    %35 = vector.shape_cast %28 : vector<1x256xi1> to vector<1x256xi1>
    %36 = vector.broadcast %35 : vector<1x256xi1> to vector<3x256xi1>
    %37 = arith.select %36, %34, %3 : vector<3x256xi1>, vector<3x256xf32>
    %c0_7 = arith.constant 0 : index
    %c0_8 = arith.constant 0 : index
    %c0_9 = arith.constant 0 : index
    %38 = vector.load %arg4[%c0_7, %c0_8, %c0_9] : memref<1x3x256xf32, #tpu.memory_space<vmem>>, vector<1x3x256xf32>
    %39 = vector.shape_cast %38 : vector<1x3x256xf32> to vector<3x256xf32>
    %40 = vector.shape_cast %37 : vector<3x256xf32> to vector<1x3x256xf32>
    tpu.vector_store %arg4[%c0_7, %c0_8, %c0_9], %40 {strides = array<i32>} : memref<1x3x256xf32, #tpu.memory_space<vmem>>, vector<1x3x256xf32>,
    return
  }
  func.func @transform_0(%arg0: i32, %arg1: i32) -> i32 {
    %c0_i32 = arith.constant 0 : i32
    %c0_i32_0 = arith.constant 0 : i32
    return %c0_i32 : i32
  }
  func.func @transform_1(%arg0: i32, %arg1: i32) -> (i32, i32, i32) {
    %c0_i32 = arith.constant 0 : i32
    %c0_i32_0 = arith.constant 0 : i32
    return %arg0, %c0_i32, %arg1 : i32, i32, i32
  }
  func.func @transform_2(%arg0: i32, %arg1: i32) -> (i32, i32, i32) {
    %c0_i32 = arith.constant 0 : i32
    %c0_i32_0 = arith.constant 0 : i32
    return %arg0, %c0_i32, %arg1 : i32, i32, i32
  }
}

</mosaic_0001>

<llo_original>
// kernel: tpu_custom_call.1
$region0: #{tpu_custom_call.1}
  #allocation0 [shape = 'u32[]', space=smem, size = 0x4, offset = 0x4, fixed_abs, tag = 'smem constant byte address 0x4 - core index']
  #allocation1 [shape = 'u32[144,128]{1,0:T(1,128)}', space=vmem, size = 0x12000, scoped, tag = 'internal scratch']
  %s0 = inlined_call_operand.vmem [shape: f32[2], index: 0, kind: input, shape index: {}]
  %s1 = inlined_call_operand.vmem [shape: f32[2,3,256], index: 1, kind: input, shape index: {}]
  %s2 = inlined_call_operand.vmem [shape: f32[2,3,256], index: 2, kind: output, shape index: {}]
  %s3 = sld [smem:[#allocation0]]
  $region45: #{tpu_custom_call.1} parent=0
    _
  %s5 = ssub.s32 1, %s3
  %s6 = scalar_select 0, %s5, %s3
  $region1: #{tpu_custom_call.1} parent=0
    #allocation2 [shape = 'u8[512]{0}', space=smem, size = 0x200, scoped, tag = 'input window, operand 0, single buffered']
    #allocation3 [shape = 's32[2]{0}', space=sflag, size = 0x8, scoped, tag = 'scoped memory for tpu_custom_call.1']
    %7 = vsyncpa [#allocation3], 0
    loop: start=0, step=1, limit=4
    $region2: #{tpu_custom_call.1} parent=1 // loop_pre_header
      _
    $region3: #{tpu_custom_call.1} parent=1 // loop_header
      %s9 = sphi 0, %s13
      %p10 = scmp.ge.s32.totalorder %s9, 4
      %s16 = sphi 0, %s28
      %s17 = sphi 0, %s24
      %s18 = sphi 0, %s16
      %s19 = sphi 0, %s17
      %s20 = sphi 0, %s18
      %s21 = sphi 0, %s19
      %s29 = sphi 0, %s29
      %s31 = sphi 0, %s29
      %s32 = sphi 0, %s31
      %s46 = sphi 0, %s32
      %s54 = sphi 0, %s56
      %s57 = sphi 0, %s54
      %s58 = sphi 0, %s57
      %s74 = sphi 0, %s58
      %s82 = sphi 0, %s84
      %s85 = sphi 0, %s82
      %s86 = sphi 0, %s85
      %s102 = sphi 0, %s86
    $region4: #{tpu_custom_call.1} parent=1 // loop_header_branch
      %12 = sbr.rel (%p10) target = $region8
    $region5: #{tpu_custom_call.1} parent=1 // loop_body
      %s14 = ssub.s32 %s9, 1
      %s15 = ssub.s32 %s9, 2
      %s22 = sadd.s32 1, %s17
      %p23 = scmp.ge.s32.totalorder %s22, 1
      %s24 = scalar_select %p23, 0, %s22
      %s25 = sadd.s32 1, %s16
      %s26 = scalar_select %p23, %s25, %s16
      %p27 = scmp.ge.s32.totalorder %s26, 2
      %s28 = scalar_select %p27, 0, %s26
      %s30 = sadd.s32 %s29, 1
      %p33 = scmp.eq.s32.totalorder %s9, 1
      %p34 = scmp.ne.s32.totalorder %s29, %s31
      %p35 = scmp.eq.s32.totalorder %s9, 0
      %p36 = por %p34, %p35
      %p37 = scmp.ne.s32.totalorder %s29, %s31
      %p38 = scmp.eq.s32.totalorder %s14, 1
      %p39 = por %p37, %p38
      %p40 = scmp.ne.s32.totalorder %s31, %s32
      %p41 = scmp.eq.s32.totalorder %s14, 0
      %p42 = por %p40, %p41
      %p43 = scmp.ne.s32.totalorder %s31, %s32
      %p44 = scmp.eq.s32.totalorder %s15, 1
      %p45 = por %p43, %p44
      %p47 = scmp.ne.s32.totalorder %s32, %s46
      %p48 = scmp.eq.s32.totalorder %s15, 0
      %p49 = por %p47, %p48
      %s50 = ssub.s32 %s16, %s28
      %s51 = ssub.s32 %s17, %s24
      %s52 = sor.u32 %s50, %s51
      %p53 = scmp.eq.s32.totalorder %s52, 0
      %s55 = sadd.s32 %s54, 1
      %s56 = scalar_select %p53, %s54, %s55
      %p59 = pneg %p53
      %p60 = scmp.eq.s32.totalorder %s9, 1
      %p61 = por %p59, %p60
      %p62 = scmp.ne.s32.totalorder %s54, %s57
      %p63 = scmp.eq.s32.totalorder %s9, 0
      %p64 = por %p62, %p63
      %p65 = scmp.ne.s32.totalorder %s54, %s57
      %p66 = scmp.eq.s32.totalorder %s14, 1
      %p67 = por %p65, %p66
      %p68 = scmp.ne.s32.totalorder %s57, %s58
      %p69 = scmp.eq.s32.totalorder %s14, 0
      %p70 = por %p68, %p69
      %p71 = scmp.ne.s32.totalorder %s57, %s58
      %p72 = scmp.eq.s32.totalorder %s15, 1
      %p73 = por %p71, %p72
      %p75 = scmp.ne.s32.totalorder %s58, %s74
      %p76 = scmp.eq.s32.totalorder %s15, 0
      %p77 = por %p75, %p76
      %s78 = ssub.s32 %s16, %s28
      %s79 = ssub.s32 %s17, %s24
      %s80 = sor.u32 %s78, %s79
      %p81 = scmp.eq.s32.totalorder %s80, 0
      %s83 = sadd.s32 %s82, 1
      %s84 = scalar_select %p81, %s82, %s83
      %p87 = pneg %p81
      %p88 = scmp.eq.s32.totalorder %s9, 1
      %p89 = por %p87, %p88
      %p90 = scmp.ne.s32.totalorder %s82, %s85
      %p91 = scmp.eq.s32.totalorder %s9, 0
      %p92 = por %p90, %p91
      %p93 = scmp.ne.s32.totalorder %s82, %s85
      %p94 = scmp.eq.s32.totalorder %s14, 1
      %p95 = por %p93, %p94
      %p96 = scmp.ne.s32.totalorder %s85, %s86
      %p97 = scmp.eq.s32.totalorder %s14, 0
      %p98 = por %p96, %p97
      %p99 = scmp.ne.s32.totalorder %s85, %s86
      %p100 = scmp.eq.s32.totalorder %s15, 1
      %p101 = por %p99, %p100
      %p103 = scmp.ne.s32.totalorder %s86, %s102
      %p104 = scmp.eq.s32.totalorder %s15, 0
      %p105 = por %p103, %p104
      %p106 = scmp.le.s32.totalorder 1, %s9
      %p107 = scmp.lt.s32.totalorder %s9, 3
      %p108 = pnand %p106, %p107
      %p109 = pneg %p108
      // Predicated region
      $region9: #{tpu_custom_call.1} parent=5 // pred_check
        _
      $region10: #{tpu_custom_call.1} parent=5 // pred_check_branch
        %111 = sbr.rel (%p108) target = $region12
      $region11: #{tpu_custom_call.1} parent=5 // pred_region
        %s112 = ssub.s32 %s9, 1
        // Predicated region
        $region13: #{tpu_custom_call.1} parent=11 // pred_check
          %p113 = pneg %p42
        $region14: #{tpu_custom_call.1} parent=11 // pred_check_branch
          %115 = sbr.rel (%p113) target = $region16
        $region15: #{tpu_custom_call.1} parent=11 // pred_region
          %s117 = ssub.s32 16, 16
          %118 = vsyncadd [#allocation3], %s117
          %s120 = sshll.u32 %s0, 4
          %s121 = int_to_ptr.vmem [resolvable:$true] %s120
          %123 = dma.vmem_to_smem %s121, 16, [#allocation2], [#allocation3]
        $region16: #{tpu_custom_call.1} parent=11 // pred_fallthru
          _
      $region12: #{tpu_custom_call.1} parent=5 // pred_fallthru
        _
      %p124 = scmp.lt.s32.totalorder %s9, 2
      // Predicated region
      $region17: #{tpu_custom_call.1} parent=5 // pred_check
        %p125 = pneg %p124
      $region18: #{tpu_custom_call.1} parent=5 // pred_check_branch
        %127 = sbr.rel (%p125) target = $region20
      $region19: #{tpu_custom_call.1} parent=5 // pred_region
        // Predicated region
        $region21: #{tpu_custom_call.1} parent=19 // pred_check
          %p128 = pneg %p64
        $region22: #{tpu_custom_call.1} parent=19 // pred_check_branch
          %130 = sbr.rel (%p128) target = $region24
        $region23: #{tpu_custom_call.1} parent=19 // pred_region
          %s131 = smul.u32 2, %s17
          %p132 = scmp.lt.s32.totalorder %s16, 1
          %s133 = scalar_select %p132, %s16, 1
          %p134 = scmp.lt.s32.totalorder %s131, 1
          %s135 = scalar_select %p134, %s131, 1
          %s136 = smul.addr %s133, 2
          %s137 = sadd.s32 %s135, %s136
          %s138 = smul.addr %s137, 4
          %s139 = scalar_lea.vmem %s1, %s138
          %s140 = smul.u32 2, %s17
        $region24: #{tpu_custom_call.1} parent=19 // pred_fallthru
          _
      $region20: #{tpu_custom_call.1} parent=5 // pred_fallthru
        _
      %p141 = scmp.le.s32.totalorder 1, %s9
      %p142 = scmp.lt.s32.totalorder %s9, 3
      %p143 = pnand %p141, %p142
      %p144 = pneg %p143
      // Predicated region
      $region25: #{tpu_custom_call.1} parent=5 // pred_check
        _
      $region26: #{tpu_custom_call.1} parent=5 // pred_check_branch
        %146 = sbr.rel (%p143) target = $region28
      $region27: #{tpu_custom_call.1} parent=5 // pred_region
        %s147 = ssub.s32 %s9, 1
        // Predicated region
        $region29: #{tpu_custom_call.1} parent=27 // pred_check
          %p148 = pneg %p42
        $region30: #{tpu_custom_call.1} parent=27 // pred_check_branch
          %150 = sbr.rel (%p148) target = $region32
        $region31: #{tpu_custom_call.1} parent=27 // pred_region
          %151 = dma.done [#allocation3], 16
        $region32: #{tpu_custom_call.1} parent=27 // pred_fallthru
          _
        %152 = sfence
        %p153 = pneg %p42
        %p154 = pneg %p39
        %s155 = smul.u32 2, %s19
        %p156 = scmp.lt.s32.totalorder %s18, 1
        %s157 = scalar_select %p156, %s18, 1
        %p158 = scmp.lt.s32.totalorder %s155, 1
        %s159 = scalar_select %p158, %s155, 1
        %s160 = smul.addr %s157, 2
        %s161 = sadd.s32 %s159, %s160
        %s162 = smul.addr %s161, 4
        %s163 = scalar_lea.vmem %s1, %s162
        %p164 = pneg %p70
        %p165 = pneg %p67
        %p166 = pneg %p98
        %p167 = pneg %p95
        %s168 = smul.u32 2, %s19
        %p169 = scmp.lt.s32.totalorder %s18, 1
        %s170 = scalar_select %p169, %s18, 1
        %p171 = scmp.lt.s32.totalorder %s168, 1
        %s172 = scalar_select %p171, %s168, 1
        %s173 = smul.addr %s170, 2
        %s174 = sadd.s32 %s172, %s173
        %s175 = smul.addr %s174, 4
        %s176 = scalar_lea.vmem %s2, %s175
        %s177 = smul.u32 2, %s19
        %p178 = scmp.lt.s32.totalorder %s18, 1
        %s179 = scalar_select %p178, %s18, 1
        %p180 = scmp.lt.s32.totalorder %s177, 1
        %s181 = scalar_select %p180, %s177, 1
        %s182 = smul.addr %s179, 2
        %s183 = sadd.s32 %s181, %s182
        %s184 = smul.addr %s183, 4
        %s185 = scalar_lea.vmem %s1, %s184
        %s186 = smul.u32 2, %s19
        %s187 = smul.u32 2, %s19
        %p188 = scmp.lt.s32.totalorder %s18, 1
        %s189 = scalar_select %p188, %s18, 1
        %p190 = scmp.lt.s32.totalorder %s187, 1
        %s191 = scalar_select %p190, %s187, 1
        %s192 = smul.addr %s189, 2
        %s193 = sadd.s32 %s191, %s192
        %s194 = smul.addr %s193, 4
        %s195 = scalar_lea.vmem %s2, %s194
        %s196 = smul.u32 2, %s19
        %s197 = sld [smem:[#allocation2 + %s18]]
        %v198 = vld [vmem:[%s185] sm:$0x77]
        %v200 = vrot.slane %v198, 5
        %v201 = vrot.slane %v200, 4
        %v203 = vmax.f32 %v198, %v201
        %v204 = vrot.slane %v198, 6
        %v205 = vrot.slane %v204, 4
        %v207 = vmax.f32 %v203, %v205
        %v208 = vmin.f32 %v198, %v201
        %v209 = vmin.f32 %v208, %v205
        %v210 = vsub.f32 %v207, %v209
        %v211 = vadd.f32 %v207, 1e-08
        %v212 = vrcp.pop %v211
        %v213 = vmul.f32 %v210, %v212
        %v214 = vstv %s197
        %v215 = vmul.f32 %v213, %v214
        %v216 = vmax.f32 %v215, 0.0
        %v217 = vmin.f32 %v216, 1.0
        %vm218 = vcmp.gt.f32.partialorder %v210, 0.0
        %v219 = vsel %vm218, %v210, 1.0
        %v220 = vmul.f32 %v217, %v207
        %v221 = vrcp.pop %v219
        %v222 = vmul.f32 %v220, %v221
        %v224 = vlaneseq
        %v225 = vshrl.u32 %v224, 7
        %v226 = vsub.s32 0, %v225
        %v227 = vrot.slane %v207, %v226
        %v228 = vlaneseq
        %v229 = vshrl.u32 %v228, 7
        %v230 = vsub.s32 4, %v229
        %v231 = vrot.slane %v207, %v230
        %v234 = vlaneseq
        %v235 = vshrl.u32 %v234, 7
        %v236 = vsub.s32 0, %v235
        %v237 = vrot.slane %v227, %v236
        %v238 = vlaneseq
        %v239 = vshrl.u32 %v238, 7
        %v240 = vsub.s32 0, %v239
        %v241 = vrot.slane %v231, %v240
        %v242 = vcombine.high %v198, %v198
        %v244 = vsub.f32 %v237, %v198
        %v245 = vsub.f32 %v241, %v242
        %v247 = vlaneseq
        %v248 = vshrl.u32 %v247, 7
        %v249 = vsub.s32 0, %v248
        %v250 = vrot.slane %v222, %v249
        %v251 = vlaneseq
        %v252 = vshrl.u32 %v251, 7
        %v253 = vsub.s32 4, %v252
        %v254 = vrot.slane %v222, %v253
        %v257 = vlaneseq
        %v258 = vshrl.u32 %v257, 7
        %v259 = vsub.s32 0, %v258
        %v260 = vrot.slane %v250, %v259
        %v261 = vlaneseq
        %v262 = vshrl.u32 %v261, 7
        %v263 = vsub.s32 0, %v262
        %v264 = vrot.slane %v254, %v263
        %v265 = vmul.f32 %v260, %v244
        %v266 = vmul.f32 %v264, %v245
        %v267 = vsub.f32 %v237, %v265
        %v268 = vsub.f32 %v241, %v266
        %v269 = vsel %vm218, 1, 0
        %v270 = vlaneseq
        %v271 = vshrl.u32 %v270, 7
        %v272 = vsub.s32 0, %v271
        %v273 = vrot.slane %v269, %v272
        %v274 = vlaneseq
        %v275 = vshrl.u32 %v274, 7
        %v276 = vsub.s32 4, %v275
        %v277 = vrot.slane %v269, %v276
        %v278 = vlaneseq
        %v279 = vshrl.u32 %v278, 7
        %v280 = vsub.s32 0, %v279
        %v281 = vrot.slane %v273, %v280
        %v282 = vlaneseq
        %v283 = vshrl.u32 %v282, 7
        %v284 = vsub.s32 0, %v283
        %v285 = vrot.slane %v277, %v284
        %vm286 = vcmp.eq.s32.totalorder %v281, 1
        %vm287 = vcmp.eq.s32.totalorder %v285, 1
        %v288 = vsel %vm286, %v267, %v198
        %v289 = vsel %vm287, %v268, %v242
        %v292 = vcombine.low %v288, %v289
        %294 = vst [vmem:[%s195] sm:$0x77] %v292
        %s295 = smul.u32 2, %s19
        %p296 = scmp.lt.s32.totalorder %s18, 1
        %s297 = scalar_select %p296, %s18, 1
        %p298 = scmp.lt.s32.totalorder %s295, 1
        %s299 = scalar_select %p298, %s295, 1
        %s300 = smul.addr %s297, 2
        %s301 = sadd.s32 %s299, %s300
        %s302 = smul.addr %s301, 4
        %s303 = scalar_lea.vmem %s2, %s302
        // Predicated region
        $region33: #{tpu_custom_call.1} parent=27 // pred_check
          %p304 = pneg %p95
        $region34: #{tpu_custom_call.1} parent=27 // pred_check_branch
          %306 = sbr.rel (%p304) target = $region36
        $region35: #{tpu_custom_call.1} parent=27 // pred_region
          %s307 = smul.u32 2, %s19
        $region36: #{tpu_custom_call.1} parent=27 // pred_fallthru
          _
      $region28: #{tpu_custom_call.1} parent=5 // pred_fallthru
        _
      %p308 = scmp.le.s32.totalorder 2, %s9
      // Predicated region
      $region37: #{tpu_custom_call.1} parent=5 // pred_check
        %p309 = pneg %p308
      $region38: #{tpu_custom_call.1} parent=5 // pred_check_branch
        %311 = sbr.rel (%p309) target = $region40
      $region39: #{tpu_custom_call.1} parent=5 // pred_region
        %s312 = ssub.s32 %s9, 2
        // Predicated region
        $region41: #{tpu_custom_call.1} parent=39 // pred_check
          %p313 = pneg %p101
        $region42: #{tpu_custom_call.1} parent=39 // pred_check_branch
          %315 = sbr.rel (%p313) target = $region44
        $region43: #{tpu_custom_call.1} parent=39 // pred_region
          %s316 = smul.u32 2, %s21
          %p317 = scmp.lt.s32.totalorder %s20, 1
          %s318 = scalar_select %p317, %s20, 1
          %p319 = scmp.lt.s32.totalorder %s316, 1
          %s320 = scalar_select %p319, %s316, 1
          %s321 = smul.addr %s318, 2
          %s322 = sadd.s32 %s320, %s321
          %s323 = smul.addr %s322, 4
          %s324 = scalar_lea.vmem %s2, %s323
        $region44: #{tpu_custom_call.1} parent=39 // pred_fallthru
          _
      $region40: #{tpu_custom_call.1} parent=5 // pred_fallthru
        _
    $region6: #{tpu_custom_call.1} parent=1 // loop_footer
      %s13 = sadd.s32 1, %s9
    $region7: #{tpu_custom_call.1} parent=1 // loop_footer_branch
      %8 = sbr.rel target = $region3
    $region8: #{tpu_custom_call.1} parent=1 // loop_exit
      _
    %325 = vsyncpa [#allocation3], 1
    %s326 = scalar_lea.sflag [#allocation3], 1
    %327 = vsyncpa %s326, 1

</llo_original>
